<compile_context>
chip_gen: v7x
topology: tpu7x:2x2x1
jax: 0.10.0
libtpu: 0.0.40
codegen_flags: <defaults>
</compile_context>

<pallas_src>
import jax
import jax.numpy as jnp
from jax.experimental import pallas as pl
from jax.experimental.pallas import tpu as pltpu

LEAKY_SLOPE = 0.2
PN_EPS = 1e-8
FACTORS = [1, 1, 1, 1, 1 / 2, 1 / 4, 1 / 8, 1 / 16, 1 / 32]

_TAPS9 = tuple((dy, dx) for dy in range(3) for dx in range(3))
_PARITY = ((0, 0), (0, 1), (1, 0), (1, 1))


# ----------------------------- in-kernel helpers ---------------------------- #

def _leaky(x):
    return jnp.where(x > 0, x, LEAKY_SLOPE * x)


def _pixel_norm(y):
    """PixelNorm over the last (channel) axis; rsqrt on the keepdims-reduced tensor."""
    inv = jax.lax.rsqrt(jnp.mean(y * y, axis=-1, keepdims=True) + PN_EPS)
    return y * inv


def _pad1_hw(x):
    """(H, W, C) -> (H+2, W+2, C) zero padding, done in VMEM in the input dtype."""
    h, w, c = x.shape
    zr = jnp.zeros((1, w, c), x.dtype)
    xp = jnp.concatenate([zr, x, zr], axis=0)
    zc = jnp.zeros((h + 2, 1, c), x.dtype)
    return jnp.concatenate([zc, xp, zc], axis=1)


def _upsample2x(x):
    """(H, W, C) -> (2H, 2W, C) nearest upsample (only used on the tiny RGB map)."""
    h, w, c = x.shape
    xe = x[:, :, None, :]
    x = jnp.concatenate([xe, xe], axis=2).reshape(h, 2 * w, c)
    xe = x[:, None, :, :]
    return jnp.concatenate([xe, xe], axis=1).reshape(2 * h, 2 * w, c)


def _im2col(scr_ref, xpad, taps, h, w, cin):
    """Write the tap slices of the padded bf16 image straight into the bf16 VMEM
    scratch (column block k holds tap k) and return the assembled
    (h*w, len(taps)*cin) patch matrix.  Column offsets k*cin never straddle a
    128-lane tile for the power-of-two channel counts used here."""
    n_pix = h * w
    for k, (dy, dx) in enumerate(taps):
        scr_ref[:, k * cin:(k + 1) * cin] = (
            xpad[dy:dy + h, dx:dx + w, :].reshape(n_pix, cin))
    return scr_ref[...]


def _conv3x3(x, w_ref, b_ref, scr_ref, do_pn):
    """WS-scaled 3x3 stride-1 pad-1 conv (scale pre-folded into w_ref) + bias +
    LeakyReLU (+ optional PixelNorm).  One K=9*Cin bf16 matmul, f32 accumulation.
    x: (H, W, Cin); returns (H, W, Cout) float32."""
    h, w, cin = x.shape
    cout = w_ref.shape[-1]
    xpad = _pad1_hw(x.astype(jnp.bfloat16))
    patches = _im2col(scr_ref, xpad, _TAPS9, h, w, cin)
    y = jnp.dot(patches, w_ref[...], preferred_element_type=jnp.float32)
    y = _leaky(y + b_ref[...])
    if do_pn:
        y = _pixel_norm(y)
    return y.reshape(h, w, cout)


def _upsample_conv3x3_pn(x, w_eff_ref, b_ref, scr_ref):
    """conv3x3(nearest_upsample2x(x)) + bias + LeakyReLU + PixelNorm, with the
    upsample fused into the patch gather: each output-pixel parity (py, px) is a
    2x2 convolution over the ORIGINAL image with an effective kernel that is a
    partial sum of the 3x3 kernel (built by _parity_fold).  2.25x fewer MACs than
    convolving a materialised upsampled image, and no 4x intermediate.
    x: (H, W, Cin); returns (2H, 2W, Cout) bfloat16."""
    h, w, cin = x.shape
    cout = w_eff_ref.shape[-1]
    xpad = _pad1_hw(x.astype(jnp.bfloat16))
    bias = b_ref[...]
    planes = []
    for p, (py, px) in enumerate(_PARITY):
        taps = tuple((py + a, px + b) for (a, b) in _PARITY)
        patches = _im2col(scr_ref, xpad, taps, h, w, cin)
        y = jnp.dot(patches, w_eff_ref[p], preferred_element_type=jnp.float32)
        y = _pixel_norm(_leaky(y + bias)).astype(jnp.bfloat16)
        planes.append(y.reshape(h, w, cout))
    # interleave: out[2i+py, 2j+px] = planes[2*py + px][i, j]
    row0 = jnp.stack([planes[0], planes[1]], axis=2).reshape(h, 2 * w, cout)
    row1 = jnp.stack([planes[2], planes[3]], axis=2).reshape(h, 2 * w, cout)
    return jnp.stack([row0, row1], axis=1).reshape(2 * h, 2 * w, cout)


# --------------------------------- kernels ---------------------------------- #

def _initial_kernel(z_ref, w_ref, b_ref, o_ref):
    """PixelNorm -> ConvTranspose2d(4x4 from 1x1 input) as one matmul -> LeakyReLU."""
    z = _pixel_norm(z_ref[...])
    y = jnp.dot(z, w_ref[...], preferred_element_type=jnp.float32) + b_ref[...]
    o_ref[...] = _leaky(y).astype(o_ref.dtype)


def _init_conv_kernel(x_ref, w_ref, b_ref, o_ref, scr_ref):
    """Initial WSConv2d(3x3) + LeakyReLU + PixelNorm; one batch element per step."""
    y = _conv3x3(x_ref[0], w_ref, b_ref, scr_ref, do_pn=True)
    o_ref[...] = y.astype(o_ref.dtype)[None]


def _prog_block_kernel(x_ref, w1_ref, b1_ref, w2_ref, b2_ref, o_ref,
                       scr1_ref, scr2_ref):
    """Fused progressive block: (upsample2x fused into conv1) + LReLU + PN, then
    conv3x3 + LReLU + PN.  bf16 activation written back."""
    hmid = _upsample_conv3x3_pn(x_ref[0], w1_ref, b1_ref, scr1_ref)
    y = _conv3x3(hmid, w2_ref, b2_ref, scr2_ref, do_pn=True)
    o_ref[...] = y.astype(o_ref.dtype)[None]


def _final_block_rgb_kernel(x_ref, w1_ref, b1_ref, w2_ref, b2_ref,
                            wu_ref, wo_ref, bf_ref, o_ref, scr1_ref, scr2_ref):
    """Last progressive block + rgb_layers[steps-1](upsample(prev)) +
    rgb_layers[steps](out) + tanh fade-in, fused.  alpha is pre-folded into
    wu/wo/bf by the wrapper.  Output written directly as NCHW (W on lanes)."""
    prev = x_ref[0]                                                  # (H, W, Cp) bf16
    h, w, cp = prev.shape
    cimg = wo_ref.shape[-1]
    hmid = _upsample_conv3x3_pn(prev, w1_ref, b1_ref, scr1_ref)      # (2H, 2W, C)
    out = _conv3x3(hmid, w2_ref, b2_ref, scr2_ref, do_pn=True)       # (2H, 2W, Cq) f32
    h2, w2, cq = out.shape
    # rgb_layers[steps](out): one (4HW, Cq) x (Cq, 3) MXU matmul (alpha folded in wo).
    rgb_out = jnp.dot(out.reshape(h2 * w2, cq).astype(jnp.bfloat16), wo_ref[...],
                      preferred_element_type=jnp.float32)
    # rgb_layers[steps-1](upsample(prev)) == upsample(rgb_layers[steps-1](prev)).
    rgb_prev = jnp.dot(prev.reshape(h * w, cp), wu_ref[...],
                       preferred_element_type=jnp.float32).reshape(h, w, cimg)
    rgb_up = _upsample2x(rgb_prev).reshape(h2 * w2, cimg)
    fade = jnp.tanh(rgb_out + rgb_up + bf_ref[...])                  # (4HW, cimg)
    o_ref[0] = jnp.transpose(fade).reshape(cimg, h2, w2)


def _rgb_kernel(x_ref, w_ref, b_ref, o_ref):
    """steps == 0 path: initial_rgb 1x1 WS conv as one matmul, NCHW output, no tanh."""
    x = x_ref[0]
    h, w, cin = x.shape
    cimg = w_ref.shape[-1]
    y = jnp.dot(x.reshape(h * w, cin), w_ref[...],
                preferred_element_type=jnp.float32) + b_ref[...]
    o_ref[0] = jnp.transpose(y).reshape(cimg, h, w)


# --------------------- weight preparation (run ONCE, not per forward) -------- #

def _fold3x3(w_hwio, gain=2.0):
    """(3,3,Cin,Cout) -> equalized-LR-scaled (9*Cin, Cout) bf16, rows = (dy, dx, ci)."""
    kh, kw, cin, cout = w_hwio.shape
    scale = (gain / (cin * kh * kw)) ** 0.5
    return (w_hwio * scale).reshape(kh * kw * cin, cout).astype(jnp.bfloat16)


def _parity_fold(w_hwio, gain=2.0):
    """(3,3,Cin,Cout) -> (4, 4*Cin, Cout) bf16 effective 2x2 kernels for
    conv3x3(upsample2x(.)) split by output-pixel parity p = 2*py + px.
    Row order within a parity: (a, b, ci), window offset (a, b) in {0,1}^2."""
    _, _, cin, cout = w_hwio.shape
    scale = (gain / (cin * 9)) ** 0.5
    w = w_hwio * scale
    rows = (jnp.stack([w[0], w[1] + w[2]], axis=0),     # output row parity 0
            jnp.stack([w[0] + w[1], w[2]], axis=0))     # output row parity 1
    effs = []
    for py in range(2):
        r = rows[py]
        effs.append(jnp.stack([r[:, 0], r[:, 1] + r[:, 2]], axis=1))   # col parity 0
        effs.append(jnp.stack([r[:, 0] + r[:, 1], r[:, 2]], axis=1))   # col parity 1
    effs = [e.reshape(4 * cin, cout) for e in effs]
    return jnp.stack(effs, axis=0).astype(jnp.bfloat16)


def _fold1x1(w_11io, gain=2.0):
    """(1,1,Cin,Cimg) -> equalized-LR-scaled (Cin, Cimg) float32."""
    _, _, cin, _ = w_11io.shape
    scale = (gain / cin) ** 0.5
    return (w_11io[0, 0] * scale).astype(jnp.float32)


# ------------------------------- op wrappers -------------------------------- #

def _vmem_limit(*buffer_bytes):
    """Scoped-VMEM limit: summed live buffers with 2x headroom, clamped to
    [32 MiB, 100 MiB].  TODO(synk): derive per chip (v7x has only 64 MiB)."""
    est = 2 * int(sum(buffer_bytes)) + (8 << 20)
    return int(min(max(est, 32 << 20), 100 << 20))


def initial_block(z, params):
    """z: (N, z_dim) -> NHWC (N, 4, 4, C) bf16."""
    n = z.shape[0]
    c16 = params["ct_w2"].shape[1]
    y = pl.pallas_call(
        _initial_kernel,
        out_shape=jax.ShapeDtypeStruct((n, c16), jnp.bfloat16),
    )(z.astype(jnp.float32), params["ct_w2"], params["ct_b2"])
    return y.reshape(n, 4, 4, c16 // 16)


def initial_conv(x, w_flat, bias):
    n, h, w, cin = x.shape
    cout = w_flat.shape[-1]
    return pl.pallas_call(
        _init_conv_kernel,
        out_shape=jax.ShapeDtypeStruct((n, h, w, cout), jnp.bfloat16),
        grid=(n,),
        in_specs=[
            pl.BlockSpec((1, h, w, cin), lambda i: (i, 0, 0, 0)),
            pl.BlockSpec((9 * cin, cout), lambda i: (0, 0)),
            pl.BlockSpec((1, cout), lambda i: (0, 0)),
        ],
        out_specs=pl.BlockSpec((1, h, w, cout), lambda i: (i, 0, 0, 0)),
        scratch_shapes=[pltpu.VMEM((h * w, 9 * cin), jnp.bfloat16)],
        compiler_params=pltpu.CompilerParams(
            dimension_semantics=("parallel",),
            vmem_limit_bytes=_vmem_limit(h * w * 9 * cin * 2,
                                         h * w * (cin + cout) * 8)),
    )(x, w_flat, bias)


def prog_block(x, blk):
    """Fused nearest-upsample2x + ConvBlock (two WSConv3x3 + LeakyReLU + PixelNorm)."""
    n, h, w, cin = x.shape
    cout = blk["w2f"].shape[-1]
    h2, w2 = 2 * h, 2 * w
    big = (h2 * w2 * 9 * cout * 2 + h * w * 4 * cin * 2 + h2 * w2 * cout * 10
           + h * w * cin * 4)
    return pl.pallas_call(
        _prog_block_kernel,
        out_shape=jax.ShapeDtypeStruct((n, h2, w2, cout), jnp.bfloat16),
        grid=(n,),
        in_specs=[
            pl.BlockSpec((1, h, w, cin), lambda i: (i, 0, 0, 0)),
            pl.BlockSpec((4, 4 * cin, cout), lambda i: (0, 0, 0)),
            pl.BlockSpec((1, cout), lambda i: (0, 0)),
            pl.BlockSpec((9 * cout, cout), lambda i: (0, 0)),
            pl.BlockSpec((1, cout), lambda i: (0, 0)),
        ],
        out_specs=pl.BlockSpec((1, h2, w2, cout), lambda i: (i, 0, 0, 0)),
        scratch_shapes=[pltpu.VMEM((h * w, 4 * cin), jnp.bfloat16),
                        pltpu.VMEM((h2 * w2, 9 * cout), jnp.bfloat16)],
        compiler_params=pltpu.CompilerParams(
            dimension_semantics=("parallel",), vmem_limit_bytes=_vmem_limit(big)),
    )(x, blk["w1_eff"], blk["b1"], blk["w2f"], blk["b2"])


def final_block_rgb(prev, blk, rgb_up_w, rgb_up_b, rgb_out_w, rgb_out_b, alpha):
    """Last block + rgb fade, fused.  prev: (N, H, W, Cp) pre-block activation.
    Returns NCHW (N, img_channels, 2H, 2W) float32."""
    n, h, w, cp = prev.shape
    cq = blk["w2f"].shape[-1]
    cimg = rgb_out_w.shape[-1]
    h2, w2 = 2 * h, 2 * w
    alpha = jnp.asarray(alpha, jnp.float32)
    # fold alpha / (1 - alpha) into the (tiny) rgb weights -> no per-alpha recompile
    wu = ((1.0 - alpha) * rgb_up_w).astype(jnp.bfloat16)
    wo = (alpha * rgb_out_w).astype(jnp.bfloat16)
    bf = (alpha * rgb_out_b + (1.0 - alpha) * rgb_up_b).reshape(1, cimg)
    bf = bf.astype(jnp.float32)
    big = (h2 * w2 * 9 * cq * 2 + h * w * 4 * cp * 2
           + h2 * w2 * (cq * 10 + cimg * 12))
    return pl.pallas_call(
        _final_block_rgb_kernel,
        out_shape=jax.ShapeDtypeStruct((n, cimg, h2, w2), jnp.float32),
        grid=(n,),
        in_specs=[
            pl.BlockSpec((1, h, w, cp), lambda i: (i, 0, 0, 0)),
            pl.BlockSpec((4, 4 * cp, cq), lambda i: (0, 0, 0)),
            pl.BlockSpec((1, cq), lambda i: (0, 0)),
            pl.BlockSpec((9 * cq, cq), lambda i: (0, 0)),
            pl.BlockSpec((1, cq), lambda i: (0, 0)),
            pl.BlockSpec((cp, cimg), lambda i: (0, 0)),
            pl.BlockSpec((cq, cimg), lambda i: (0, 0)),
            pl.BlockSpec((1, cimg), lambda i: (0, 0)),
        ],
        out_specs=pl.BlockSpec((1, cimg, h2, w2), lambda i: (i, 0, 0, 0)),
        scratch_shapes=[pltpu.VMEM((h * w, 4 * cp), jnp.bfloat16),
                        pltpu.VMEM((h2 * w2, 9 * cq), jnp.bfloat16)],
        compiler_params=pltpu.CompilerParams(
            dimension_semantics=("parallel",), vmem_limit_bytes=_vmem_limit(big)),
    )(prev, blk["w1_eff"], blk["b1"], blk["w2f"], blk["b2"], wu, wo, bf)


def rgb_only(x, rgb_w, rgb_b):
    """steps == 0 path: initial_rgb(out) in NCHW, no tanh."""
    n, h, w, cin = x.shape
    cimg = rgb_w.shape[-1]
    return pl.pallas_call(
        _rgb_kernel,
        out_shape=jax.ShapeDtypeStruct((n, cimg, h, w), jnp.float32),
        grid=(n,),
        in_specs=[
            pl.BlockSpec((1, h, w, cin), lambda i: (i, 0, 0, 0)),
            pl.BlockSpec((cin, cimg), lambda i: (0, 0)),
            pl.BlockSpec((1, cimg), lambda i: (0, 0)),
        ],
        out_specs=pl.BlockSpec((1, cimg, h, w), lambda i: (i, 0, 0, 0)),
        compiler_params=pltpu.CompilerParams(dimension_semantics=("parallel",)),
    )(x, rgb_w.astype(jnp.bfloat16), rgb_b.reshape(1, cimg).astype(jnp.float32))


# ------------------------------- parameters --------------------------------- #

def init_raw_params(key, z_dim, in_channels, img_channels=3):
    """Random parameters mirroring the PyTorch module structure (HWIO weights)."""
    keys = iter(jax.random.split(key, 64))
    params = {
        # initial: ConvTranspose2d(z_dim, C, 4) -- plain layer with its own bias
        "ct_w": 0.05 * jax.random.normal(next(keys), (z_dim, in_channels, 4, 4),
                                         jnp.float32),
        "ct_b": 0.01 * jax.random.normal(next(keys), (in_channels,), jnp.float32),
        # initial: WSConv2d(C, C, 3) -- normal weights, zero bias
        "init_w": jax.random.normal(next(keys), (3, 3, in_channels, in_channels),
                                    jnp.float32),
        "init_b": jnp.zeros((in_channels,), jnp.float32),
    }
    rgb_w = [jax.random.normal(next(keys), (1, 1, in_channels, img_channels),
                               jnp.float32)]
    rgb_b = [jnp.zeros((img_channels,), jnp.float32)]
    blocks = []
    for i in range(len(FACTORS) - 1):
        c_in = int(in_channels * FACTORS[i])
        c_out = int(in_channels * FACTORS[i + 1])
        blocks.append({
            "w1": jax.random.normal(next(keys), (3, 3, c_in, c_out), jnp.float32),
            "b1": jnp.zeros((c_out,), jnp.float32),
            "w2": jax.random.normal(next(keys), (3, 3, c_out, c_out), jnp.float32),
            "b2": jnp.zeros((c_out,), jnp.float32),
        })
        rgb_w.append(jax.random.normal(next(keys), (1, 1, c_out, img_channels),
                                       jnp.float32))
        rgb_b.append(jnp.zeros((img_channels,), jnp.float32))
    params["blocks"] = blocks
    params["rgb_w"] = rgb_w
    params["rgb_b"] = rgb_b
    return params


def prepare_params(raw):
    """Fold equalized-LR scales / layouts into bf16 kernel-ready weights ONCE,
    outside the per-forward path."""
    z_dim, c = raw["ct_w"].shape[0], raw["ct_w"].shape[1]
    # ConvT weight columns permuted to (ky, kx, c) so the matmul result reshapes
    # straight to NHWC without a transpose.
    ct_w2 = raw["ct_w"].transpose(0, 2, 3, 1).reshape(z_dim, 16 * c)
    p = {
        "ct_w2": ct_w2.astype(jnp.float32),
        "ct_b2": jnp.tile(raw["ct_b"], 16).reshape(1, 16 * c).astype(jnp.float32),
        "init_wf": _fold3x3(raw["init_w"]),
        "init_b": raw["init_b"].reshape(1, c).astype(jnp.float32),
        "rgb_w": [_fold1x1(w) for w in raw["rgb_w"]],
        "rgb_b": [b.astype(jnp.float32) for b in raw["rgb_b"]],
    }
    blocks = []
    for blk in raw["blocks"]:
        cout = blk["w1"].shape[-1]
        blocks.append({
            "w1_eff": _parity_fold(blk["w1"]),
            "b1": blk["b1"].reshape(1, cout).astype(jnp.float32),
            "w2f": _fold3x3(blk["w2"]),
            "b2": blk["b2"].reshape(1, cout).astype(jnp.float32),
        })
    p["blocks"] = blocks
    return p


# --------------------------------- forward ----------------------------------- #

def generator_pro_forward(params, x_nchw, alpha, steps):
    """x_nchw: (N, z_dim, 1, 1) latent -> NCHW image (N, 3, 4*2**steps, 4*2**steps)."""
    n, z_dim = x_nchw.shape[0], x_nchw.shape[1]
    z = x_nchw.reshape(n, z_dim)

    # initial: PixelNorm -> ConvT(4x4) -> LReLU, then WSConv3x3 -> LReLU -> PN
    y = initial_block(z, params)
    out = initial_conv(y, params["init_wf"], params["init_b"])

    if steps == 0:
        return rgb_only(out, params["rgb_w"][0], params["rgb_b"][0])

    for step in range(steps - 1):                      # all but the last block
        out = prog_block(out, params["blocks"][step])

    # last block fused with rgb(upsample(prev)), rgb(out) and the tanh fade-in
    return final_block_rgb(out, params["blocks"][steps - 1],
                           params["rgb_w"][steps - 1], params["rgb_b"][steps - 1],
                           params["rgb_w"][steps], params["rgb_b"][steps], alpha)


# ----------------------------------- main ------------------------------------ #

if __name__ == "__main__":
    z_dim, in_channels, img_channels = 16, 32, 3
    batch, steps, alpha = 2, 2, 0.7

    key = jax.random.PRNGKey(0)
    k_params, k_x = jax.random.split(key)
    raw = init_raw_params(k_params, z_dim, in_channels, img_channels)
    params = prepare_params(raw)          # scale-folded bf16 weights, built once
    x = jax.random.normal(k_x, (batch, z_dim, 1, 1), jnp.float32)

    out = generator_pro_forward(params, x, alpha, steps)
    out = jax.block_until_ready(out)

    expected_hw = 4 * (2 ** steps)
    assert out.shape == (batch, img_channels, expected_hw, expected_hw), out.shape
    assert bool(jnp.all(jnp.isfinite(out)))
    print("KERNEL_OK")
</pallas_src>

<mosaic_0001>
module attributes {stable_mosaic.version = 11 : i64} {
  func.func @_initial_kernel(%arg0: memref<2x16xf32, #tpu.memory_space<vmem>>, %arg1: memref<16x512xf32, #tpu.memory_space<vmem>>, %arg2: memref<1x512xf32, #tpu.memory_space<vmem>>, %arg3: memref<2x512xbf16, #tpu.memory_space<vmem>>) attributes {dimension_semantics = [], scalar_prefetch = 0 : i64, scratch_operands = 0 : i64, tpu.core_type = #tpu.core_type<tc>} {
    %c0 = arith.constant 0 : index
    %c0_0 = arith.constant 0 : index
    %0 = vector.load %arg0[%c0, %c0_0] : memref<2x16xf32, #tpu.memory_space<vmem>>, vector<2x16xf32>
    %1 = arith.mulf %0, %0 : vector<2x16xf32>
    %cst = arith.constant dense<0.000000e+00> : vector<2xf32>
    %2 = vector.multi_reduction <add>, %1, %cst [1] : vector<2x16xf32> to vector<2xf32>
    %3 = vector.shape_cast %2 : vector<2xf32> to vector<2x1xf32>
    %cst_1 = arith.constant 1.600000e+01 : f32
    %4 = vector.broadcast %cst_1 : f32 to vector<2x1xf32>
    %5 = arith.divf %3, %4 : vector<2x1xf32>
    %cst_2 = arith.constant 9.99999993E-9 : f32
    %6 = vector.broadcast %cst_2 : f32 to vector<2x1xf32>
    %7 = arith.addf %5, %6 : vector<2x1xf32>
    %8 = math.rsqrt %7 : vector<2x1xf32>
    %9 = vector.broadcast %8 : vector<2x1xf32> to vector<2x16xf32>
    %10 = arith.mulf %0, %9 : vector<2x16xf32>
    %c0_3 = arith.constant 0 : index
    %c0_4 = arith.constant 0 : index
    %11 = vector.load %arg1[%c0_3, %c0_4] : memref<16x512xf32, #tpu.memory_space<vmem>>, vector<16x512xf32>
    %cst_5 = arith.constant dense<0.000000e+00> : vector<2x512xf32>
    %12 = tpu.matmul %10, %11, %cst_5 {dimension_numbers = #tpu.dot_dimension_numbers<[1], [0], [0], [1], [0, 0, 1, 1], [], []>} : vector<2x16xf32>, vector<16x512xf32>, vector<2x512xf32> -> vector<2x512xf32>
    %c0_6 = arith.constant 0 : index
    %c0_7 = arith.constant 0 : index
    %13 = vector.load %arg2[%c0_6, %c0_7] : memref<1x512xf32, #tpu.memory_space<vmem>>, vector<1x512xf32>
    %14 = vector.broadcast %13 : vector<1x512xf32> to vector<2x512xf32>
    %15 = arith.addf %12, %14 : vector<2x512xf32>
    %cst_8 = arith.constant 0.000000e+00 : f32
    %16 = vector.broadcast %cst_8 : f32 to vector<2x512xf32>
    %17 = arith.cmpf ogt, %15, %16 : vector<2x512xf32>
    %cst_9 = arith.constant 2.000000e-01 : f32
    %18 = vector.broadcast %cst_9 : f32 to vector<2x512xf32>
    %19 = arith.mulf %18, %15 : vector<2x512xf32>
    %20 = arith.select %17, %15, %19 : vector<2x512xi1>, vector<2x512xf32>
    %21 = arith.truncf %20 : vector<2x512xf32> to vector<2x512xbf16>
    %c0_10 = arith.constant 0 : index
    %c0_11 = arith.constant 0 : index
    %22 = vector.load %arg3[%c0_10, %c0_11] : memref<2x512xbf16, #tpu.memory_space<vmem>>, vector<2x512xbf16>
    tpu.vector_store %arg3[%c0_10, %c0_11], %21 {strides = array<i32>} : memref<2x512xbf16, #tpu.memory_space<vmem>>, vector<2x512xbf16>,
    return
  }
}

</mosaic_0001>

<llo_original>
// kernel: tpu_custom_call.1
$region0: #{tpu_custom_call.1}
  #allocation0 [shape = 'u32[]', space=smem, size = 0x4, offset = 0x4, fixed_abs, tag = 'smem constant byte address 0x4 - core index']
  #allocation1 [shape = 'u32[144,128]{1,0:T(1,128)}', space=vmem, size = 0x12000, scoped, tag = 'internal scratch']
  %s0 = inlined_call_operand.hbm [shape: f32[2,16], index: 0, kind: input, shape index: {}]
  %s1 = inlined_call_operand.hbm [shape: f32[16,512], index: 1, kind: input, shape index: {}]
  %s2 = inlined_call_operand.vmem [shape: f32[1,512], index: 2, kind: input, shape index: {}]
  %s3 = inlined_call_operand.hbm [shape: bf16[2,512], index: 3, kind: output, shape index: {}]
  %s4 = sld [smem:[#allocation0]]
  $region30: #{tpu_custom_call.1} parent=0
    _
  %s6 = ssub.s32 1, %s4
  %s7 = scalar_select 0, %s6, %s4
  $region1: #{tpu_custom_call.1} parent=0
    #allocation2 [shape = 'u8[1024]{0}', space=vmem, size = 0x400, scoped, tag = 'input window, operand 0, single buffered']
    #allocation3 [shape = 's32[1]{0}', space=sflag, size = 0x4, scoped, tag = 'scoped memory for tpu_custom_call.1']
    #allocation4 [shape = 's32[1]{0}', space=sflag, size = 0x4, scoped, tag = 'scoped memory for tpu_custom_call.1']
    #allocation5 [shape = 'u8[32768]{0}', space=vmem, size = 0x8000, scoped, tag = 'input window, operand 1, single buffered']
    #allocation6 [shape = 's32[1]{0}', space=sflag, size = 0x4, scoped, tag = 'scoped memory for tpu_custom_call.1']
    #allocation7 [shape = 'u8[2048]{0}', space=vmem, size = 0x800, scoped, tag = 'output window, operand 0, single buffered']
    %8 = vsyncpa [#allocation3], 0
    %9 = vsyncpa [#allocation6], 0
    %10 = vsyncpa [#allocation4], 0
    // Predicated region
    $region2: #{tpu_custom_call.1} parent=1 // pred_check
      _
    $region3: #{tpu_custom_call.1} parent=1 // pred_check_branch
      %12 = sbr.rel (0) target = $region5
    $region4: #{tpu_custom_call.1} parent=1 // pred_region
      %s14 = ssub.s32 32, 32
      %15 = vsyncadd [#allocation3], %s14
      %s17 = sshll.u32 [#allocation2], 4
      %s18 = int_to_ptr.vmem [resolvable:$true] %s17
      %20 = dma.hbm_to_vmem [thread:$0]  %s0, 32, %s18, [#allocation3]
    $region5: #{tpu_custom_call.1} parent=1 // pred_fallthru
      _
    // Predicated region
    $region6: #{tpu_custom_call.1} parent=1 // pred_check
      _
    $region7: #{tpu_custom_call.1} parent=1 // pred_check_branch
      %22 = sbr.rel (0) target = $region9
    $region8: #{tpu_custom_call.1} parent=1 // pred_region
      %s24 = ssub.s32 1024, 1024
      %25 = vsyncadd [#allocation6], %s24
      %s26 = sshll.u32 [#allocation5], 4
      %s27 = int_to_ptr.vmem [resolvable:$true] %s26
      %32 = dma.hbm_to_vmem [thread:$0]  %s1, 1024, %s27, [#allocation6], 512, 512, 32
    $region9: #{tpu_custom_call.1} parent=1 // pred_fallthru
      _
    // Predicated region
    $region10: #{tpu_custom_call.1} parent=1 // pred_check
      _
    $region11: #{tpu_custom_call.1} parent=1 // pred_check_branch
      %34 = sbr.rel (0) target = $region13
    $region12: #{tpu_custom_call.1} parent=1 // pred_region
      _
    $region13: #{tpu_custom_call.1} parent=1 // pred_fallthru
      _
    // Predicated region
    $region14: #{tpu_custom_call.1} parent=1 // pred_check
      _
    $region15: #{tpu_custom_call.1} parent=1 // pred_check_branch
      %36 = sbr.rel (0) target = $region17
    $region16: #{tpu_custom_call.1} parent=1 // pred_region
      %37 = dma.done [#allocation3], 32
    $region17: #{tpu_custom_call.1} parent=1 // pred_fallthru
      _
    // Predicated region
    $region18: #{tpu_custom_call.1} parent=1 // pred_check
      _
    $region19: #{tpu_custom_call.1} parent=1 // pred_check_branch
      %39 = sbr.rel (0) target = $region21
    $region20: #{tpu_custom_call.1} parent=1 // pred_region
      %40 = dma.done [#allocation6], 1024
    $region21: #{tpu_custom_call.1} parent=1 // pred_fallthru
      _
    %v41 = vld [vmem:[#allocation2] sm:$0x3]
    %v42 = vmul.f32 %v41, %v41
    %vm43 = vcmask 123904
    %v44 = vsel %vm43, %v42, 0.0
    %45 = vadd.xlane.f32.xlu0 %v44
    %v46 = vpop.xlane.xlu0 %45
    %v47 = vrcp.pop 16.0
    %v48 = vmul.f32 %v46, %v47
    %v49 = vadd.f32 %v48, 1e-08
    %v50 = vrsqrt.pop %v49
    %v51 = vmul.f32 %v41, %v50
    %v52 = vld [vmem:[#allocation5] sm:$0xff]
    %v53 = vld [vmem:[#allocation5 + $0x8] sm:$0xff]
    %v54 = vld [vmem:[#allocation5 + $0x10] sm:$0xff]
    %v55 = vld [vmem:[#allocation5 + $0x18] sm:$0xff]
    %v56 = vld [vmem:[#allocation5 + $0x20] sm:$0xff]
    %v57 = vld [vmem:[#allocation5 + $0x28] sm:$0xff]
    %v58 = vld [vmem:[#allocation5 + $0x30] sm:$0xff]
    %v59 = vld [vmem:[#allocation5 + $0x38] sm:$0xff]
    %v60 = vld [vmem:[%s2] sm:$0xf]
    %v62 = vlaneseq
    %v63 = vshrl.u32 %v62, 7
    %v64 = vsub.s32 0, %v63
    %v65 = vrot.slane %v60, %v64
    %v66 = vlaneseq
    %v67 = vshrl.u32 %v66, 7
    %v68 = vsub.s32 1, %v67
    %v69 = vrot.slane %v60, %v68
    %v70 = vlaneseq
    %v71 = vshrl.u32 %v70, 7
    %v72 = vsub.s32 2, %v71
    %v73 = vrot.slane %v60, %v72
    %v74 = vlaneseq
    %v75 = vshrl.u32 %v74, 7
    %v76 = vsub.s32 3, %v75
    %v77 = vrot.slane %v60, %v76
    %vm82 = vcmask 130048
    %v84 = vsel %vm82, %v51, 0
    %86 = vmatprep.subr.mxu0 %v53
    %87 = vmatpush1.msra.mxu0 %v52
    %88 = vmatprep.subr.mxu0 %v57
    %89 = vmatpush1.msra.mxu0 %v56
    %90 = vmatprep.subr.mxu0 0.0
    %91 = vmatpush1.msra.mxu0 0.0
    %92 = vmatprep.subr.mxu0 0.0
    %93 = vmatpush1.msra.mxu0 0.0
    %94 = vmatprep.subr.mxu0 0.0
    %95 = vmatpush1.msra.mxu0 0.0
    %96 = vmatprep.subr.mxu0 0.0
    %97 = vmatpush1.msra.mxu0 0.0
    %98 = vmatprep.subr.mxu0 0.0
    %99 = vmatpush1.msra.mxu0 0.0
    %100 = vmatprep.subr.mxu0 0.0
    %101 = vmatpush1.msra.mxu0 0.0
    %102 = vmatprep.subr.mxu0 0.0
    %103 = vmatpush1.msra.mxu0 0.0
    %104 = vmatprep.subr.mxu0 0.0
    %105 = vmatpush1.msra.mxu0 0.0
    %106 = vmatprep.subr.mxu0 0.0
    %107 = vmatpush1.msra.mxu0 0.0
    %108 = vmatprep.subr.mxu0 0.0
    %109 = vmatpush1.msra.mxu0 0.0
    %110 = vmatprep.subr.mxu0 0.0
    %111 = vmatpush1.msra.mxu0 0.0
    %112 = vmatprep.subr.mxu0 0.0
    %113 = vmatpush1.msra.mxu0 0.0
    %114 = vmatprep.subr.mxu0 0.0
    %115 = vmatpush1.msra.mxu0 0.0
    %116 = vmatprep.subr.mxu0 0.0
    %117 = vmatpush1.msra.mxu0 0.0
    %118 = vmatprep.subr.mxu0 0.0
    %119 = vmatpush1.msra.mxu0 0.0
    %120 = vmatprep.subr.mxu0 0.0
    %121 = vmatpush1.msra.mxu0 0.0
    %122 = vmatprep.subr.mxu0 0.0
    %123 = vmatpush1.msra.mxu0 0.0
    %124 = vmatprep.subr.mxu0 0.0
    %125 = vmatpush1.msra.mxu0 0.0
    %126 = vmatprep.subr.mxu0 0.0
    %127 = vmatpush1.msra.mxu0 0.0
    %128 = vmatprep.subr.mxu0 0.0
    %129 = vmatpush1.msra.mxu0 0.0
    %130 = vmatprep.subr.mxu0 0.0
    %131 = vmatpush1.msra.mxu0 0.0
    %132 = vmatprep.subr.mxu0 0.0
    %133 = vmatpush1.msra.mxu0 0.0
    %134 = vmatprep.subr.mxu0 0.0
    %135 = vmatpush1.msra.mxu0 0.0
    %136 = vmatprep.subr.mxu0 0.0
    %137 = vmatpush1.msra.mxu0 0.0
    %138 = vmatprep.subr.mxu0 0.0
    %139 = vmatpush1.msra.mxu0 0.0
    %140 = vmatprep.subr.mxu0 0.0
    %141 = vmatpush1.msra.mxu0 0.0
    %142 = vmatprep.subr.mxu0 0.0
    %143 = vmatpush1.msra.mxu0 0.0
    %144 = vmatprep.subr.mxu0 0.0
    %145 = vmatpush1.msra.mxu0 0.0
    %146 = vmatprep.subr.mxu0 0.0
    %147 = vmatpush1.msra.mxu0 0.0
    %148 = vmatprep.subr.mxu0 0.0
    %149 = vmatpush1.msra.mxu0 0.0
    %150 = vmatprep.mubr.f32.mxu0 0.0
    %151 = vmatmul.mubr.f32.gmra.mrb[0].mxu0 %v84
    %v152 = vpop.f32.mrb[0].mxu0
    %v153 = vadd.f32 %v65, %v152
    %v154 = vpop.f32.mrb[0].mxu0
    %v155 = vadd.f32 %v69, %v154
    %156 = vdwg.mxu0
    %157 = vmatprep.subr.mxu0 %v55
    %158 = vmatpush1.msra.mxu0 %v54
    %159 = vmatprep.subr.mxu0 %v59
    %160 = vmatpush1.msra.mxu0 %v58
    %161 = vmatprep.subr.mxu0 0.0
    %162 = vmatpush1.msra.mxu0 0.0
    %163 = vmatprep.subr.mxu0 0.0
    %164 = vmatpush1.msra.mxu0 0.0
    %165 = vmatprep.subr.mxu0 0.0
    %166 = vmatpush1.msra.mxu0 0.0
    %167 = vmatprep.subr.mxu0 0.0
    %168 = vmatpush1.msra.mxu0 0.0
    %169 = vmatprep.subr.mxu0 0.0
    %170 = vmatpush1.msra.mxu0 0.0
    %171 = vmatprep.subr.mxu0 0.0
    %172 = vmatpush1.msra.mxu0 0.0
    %173 = vmatprep.subr.mxu0 0.0
    %174 = vmatpush1.msra.mxu0 0.0
    %175 = vmatprep.subr.mxu0 0.0
    %176 = vmatpush1.msra.mxu0 0.0
    %177 = vmatprep.subr.mxu0 0.0
    %178 = vmatpush1.msra.mxu0 0.0
    %179 = vmatprep.subr.mxu0 0.0
    %180 = vmatpush1.msra.mxu0 0.0
    %181 = vmatprep.subr.mxu0 0.0
    %182 = vmatpush1.msra.mxu0 0.0
    %183 = vmatprep.subr.mxu0 0.0
    %184 = vmatpush1.msra.mxu0 0.0
    %185 = vmatprep.subr.mxu0 0.0
    %186 = vmatpush1.msra.mxu0 0.0
    %187 = vmatprep.subr.mxu0 0.0
    %188 = vmatpush1.msra.mxu0 0.0
    %189 = vmatprep.subr.mxu0 0.0
    %190 = vmatpush1.msra.mxu0 0.0
    %191 = vmatprep.subr.mxu0 0.0
    %192 = vmatpush1.msra.mxu0 0.0
    %193 = vmatprep.subr.mxu0 0.0
    %194 = vmatpush1.msra.mxu0 0.0
    %195 = vmatprep.subr.mxu0 0.0
    %196 = vmatpush1.msra.mxu0 0.0
    %197 = vmatprep.subr.mxu0 0.0
    %198 = vmatpush1.msra.mxu0 0.0
    %199 = vmatprep.subr.mxu0 0.0
    %200 = vmatpush1.msra.mxu0 0.0
    %201 = vmatprep.subr.mxu0 0.0
    %202 = vmatpush1.msra.mxu0 0.0
    %203 = vmatprep.subr.mxu0 0.0
    %204 = vmatpush1.msra.mxu0 0.0
    %205 = vmatprep.subr.mxu0 0.0
    %206 = vmatpush1.msra.mxu0 0.0
    %207 = vmatprep.subr.mxu0 0.0
    %208 = vmatpush1.msra.mxu0 0.0
    %209 = vmatprep.subr.mxu0 0.0
    %210 = vmatpush1.msra.mxu0 0.0
    %211 = vmatprep.subr.mxu0 0.0
    %212 = vmatpush1.msra.mxu0 0.0
    %213 = vmatprep.subr.mxu0 0.0
    %214 = vmatpush1.msra.mxu0 0.0
    %215 = vmatprep.subr.mxu0 0.0
    %216 = vmatpush1.msra.mxu0 0.0
    %217 = vmatprep.subr.mxu0 0.0
    %218 = vmatpush1.msra.mxu0 0.0
    %219 = vmatprep.subr.mxu0 0.0
    %220 = vmatpush1.msra.mxu0 0.0
    %221 = vmatprep.mubr.f32.mxu0 0.0
    %222 = vmatmul.mubr.f32.gmra.mrb[0].mxu0 %v84
    %v223 = vpop.f32.mrb[0].mxu0
    %v224 = vadd.f32 %v73, %v223
    %v225 = vpop.f32.mrb[0].mxu0
    %v226 = vadd.f32 %v77, %v225
    %227 = vdwg.mxu0
    %vm228 = vcmp.gt.f32.partialorder %v153, 0.0
    %vm229 = vcmp.gt.f32.partialorder %v155, 0.0
    %vm230 = vcmp.gt.f32.partialorder %v224, 0.0
    %vm231 = vcmp.gt.f32.partialorder %v226, 0.0
    %v232 = vmul.f32 %v153, 0.2
    %v233 = vmul.f32 %v155, 0.2
    %v234 = vmul.f32 %v224, 0.2
    %v235 = vmul.f32 %v226, 0.2
    %v236 = vsel %vm228, %v153, %v232
    %v237 = vsel %vm229, %v155, %v233
    %v238 = vsel %vm230, %v224, %v234
    %v239 = vsel %vm231, %v226, %v235
    %v240 = vpack.c.bf16 %v236, %v236
    %v241 = vpack.c.bf16 %v237, %v237
    %v242 = vpack.c.bf16 %v238, %v238
    %v243 = vpack.c.bf16 %v239, %v239
    %v248 = vcombine.low %v240, %v241
    %v249 = vcombine.low %v242, %v243
    %v251 = vunpack.c.l.s4 1966171168
    %v252 = vunpack.c.0.s8 %v251
    %v253 = vlaneseq
    %v254 = vshrl.u32 %v253, 7
    %v255 = vsub.s32 %v252, %v254
    %v256 = vrot.slane %v248, %v255
    %v258 = vunpack.c.l.s4 1966171168
    %v259 = vunpack.c.0.s8 %v258
    %v260 = vlaneseq
    %v261 = vshrl.u32 %v260, 7
    %v262 = vsub.s32 %v259, %v261
    %v263 = vrot.slane %v249, %v262
    %v264 = vcombine.low %v256, %v263
    %v266 = vunpack.c.l.s4 1966171168
    %v267 = vunpack.c.0.s8 %v266
    %v268 = vlaneseq
    %v269 = vshrl.u32 %v268, 7
    %v270 = vsub.s32 %v267, %v269
    %v271 = vrot.slane %v264, %v270
    %273 = vst [vmem:[#allocation7] sm:$0xf] %v271
    // Predicated region
    $region22: #{tpu_custom_call.1} parent=1 // pred_check
      _
    $region23: #{tpu_custom_call.1} parent=1 // pred_check_branch
      %275 = sbr.rel (0) target = $region25
    $region24: #{tpu_custom_call.1} parent=1 // pred_region
      %s277 = ssub.s32 64, 64
      %278 = vsyncadd [#allocation4], %s277
      %s280 = sshll.u32 [#allocation7], 4
      %s281 = int_to_ptr.vmem [resolvable:$true] %s280
      %283 = dma.vmem_to_hbm [thread:$0]  %s281, 64, %s3, [#allocation4]
    $region25: #{tpu_custom_call.1} parent=1 // pred_fallthru
      _
    // Predicated region
    $region26: #{tpu_custom_call.1} parent=1 // pred_check
      _
    $region27: #{tpu_custom_call.1} parent=1 // pred_check_branch
      %285 = sbr.rel (0) target = $region29
    $region28: #{tpu_custom_call.1} parent=1 // pred_region
      %286 = dma.done [#allocation4], 64
    $region29: #{tpu_custom_call.1} parent=1 // pred_fallthru
      _
    %287 = vsyncpa [#allocation3], 1
    %288 = vsyncpa [#allocation6], 1
    %289 = vsyncpa [#allocation4], 1

</llo_original>
